<compile_context>
chip_gen: v5e
topology: v5e:2x2
jax: 0.10.0
libtpu: 0.0.40
codegen_flags: <defaults>
</compile_context>

<pallas_src>
import jax
import jax.numpy as jnp
from jax.experimental import pallas as pl
from jax.experimental.pallas import tpu as pltpu


N_INPUTS = 4     # CartPole-v1 observation dim
N_HIDDEN = 32
N_OUTPUTS = 2    # CartPole-v1 action dim

# Parameter-slab layout (one (40, 128) f32 VMEM tile, transposed orientation):
#   rows 0..31,  cols 0..3  : w1^T  (n_hidden, n_inputs)
#   rows 0..31,  col  4     : b1    (n_hidden, 1) column vector
#   rows 32..33, cols 0..31 : w2^T  (n_outputs, n_hidden)
#   rows 32..33, col  32    : b2    (n_outputs, 1) column vector
_SLAB_ROWS = 40
_SLAB_COLS = 128
assert N_HIDDEN + N_OUTPUTS <= _SLAB_ROWS and N_HIDDEN + 1 <= _SLAB_COLS


def pack_params(w1, b1, w2, b2):
    """Pack all parameters into one (40, 128) f32 slab (done once at init)."""
    p = jnp.zeros((_SLAB_ROWS, _SLAB_COLS), jnp.float32)
    p = p.at[:N_HIDDEN, :N_INPUTS].set(w1.T)
    p = p.at[:N_HIDDEN, N_INPUTS:N_INPUTS + 1].set(b1.reshape(N_HIDDEN, 1))
    p = p.at[N_HIDDEN:N_HIDDEN + N_OUTPUTS, :N_HIDDEN].set(w2.T)
    p = p.at[N_HIDDEN:N_HIDDEN + N_OUTPUTS, N_HIDDEN:N_HIDDEN + 1].set(
        b2.reshape(N_OUTPUTS, 1))
    return p


def _policy_kernel(x_ref, p_ref, o_ref, logits_ref):
    """One batch tile: x_ref (n_inputs, TB) -> logits into resident scratch.

    The last grid step additionally runs the exact dim=0 (batch-axis) softmax
    over the full resident (n_outputs, B) logits and writes the lane-dense
    output in one unmasked store.
    """
    t = pl.program_id(0)
    tb = x_ref.shape[-1]

    # Static slices out of the single parameter slab (one DMA, one load).
    p = p_ref[...]                                                  # (40, 128)
    w1t = p[:N_HIDDEN, :N_INPUTS]                                   # (32, 4)
    b1c = p[:N_HIDDEN, N_INPUTS:N_INPUTS + 1]                       # (32, 1)
    w2t = p[N_HIDDEN:N_HIDDEN + N_OUTPUTS, :N_HIDDEN]               # (2, 32)
    b2c = p[N_HIDDEN:N_HIDDEN + N_OUTPUTS, N_HIDDEN:N_HIDDEN + 1]   # (2, 1)

    x = x_ref[...]                                                  # (4, TB)

    # fc1 + relu on the MXU: batch rides the wide (lane) output axis, f32 acc.
    h = jnp.dot(w1t, x, preferred_element_type=jnp.float32) + b1c   # (32, TB)
    h = jnp.maximum(h, 0.0)

    # fc2 on the MXU: (2, 32) @ (32, TB) -> lane-dense (2, TB) logits.
    logits = jnp.dot(w2t, h, preferred_element_type=jnp.float32) + b2c

    # Stash this tile's logits in the resident accumulator at its column slot.
    col = pl.multiple_of(t * tb, 128)
    logits_ref[:, pl.ds(col, tb)] = logits

    # Final step: softmax over dim=0 of the original (B, n_outputs) layout ==
    # a per-action-row reduce over the lane (batch) axis here.  Exact
    # reciprocal on a (2, 1) tensor is free; approx=True would only add error.
    @pl.when(t == pl.num_programs(0) - 1)
    def _():
        lg = logits_ref[...]                                        # (2, B)
        m = jnp.max(lg, axis=-1, keepdims=True)                     # (2, 1)
        e = jnp.exp(lg - m)
        denom = jnp.sum(e, axis=-1, keepdims=True)                  # (2, 1)
        o_ref[...] = (e * pl.reciprocal(denom, approx=False)).astype(o_ref.dtype)


def _vmem_limit_bytes(batch, tile_b):
    f32 = 4
    x_bufs = 2 * 8 * tile_b * f32                  # double-buffered x tile (4->8 pad)
    p_bufs = 2 * _SLAB_ROWS * _SLAB_COLS * f32     # param slab
    out_buf = 8 * batch * f32                      # (2, B) output block (2->8 pad)
    acc_buf = 8 * batch * f32                      # (2, B) resident logits scratch
    work = (N_HIDDEN + 32) * tile_b * f32          # h + per-tile temporaries
    # Cap at 32 MiB: safe on v5e/v6e and within v7x's 64 MiB physical VMEM.
    return min(x_bufs + p_bufs + out_buf + acc_buf + work + (4 << 20),
               32 * 1024 * 1024)


def policy_forward(x, packed_params, *, tile_b=512):
    """x: (B, n_inputs) f32 -> (B, n_outputs) softmax(dim=0) probabilities."""
    B = x.shape[0]
    assert B % 128 == 0, "pad the rollout batch to a multiple of 128"
    tb = min(tile_b, B)
    assert tb % 128 == 0 and B % tb == 0
    num_tiles = B // tb

    xT = x.T  # (n_inputs, B): batch on the lane axis (layout plumbing only)

    out_t = pl.pallas_call(
        _policy_kernel,
        out_shape=jax.ShapeDtypeStruct((N_OUTPUTS, B), jnp.float32),
        grid_spec=pltpu.PrefetchScalarGridSpec(
            num_scalar_prefetch=0,
            grid=(num_tiles,),
            in_specs=[
                pl.BlockSpec((N_INPUTS, tb), lambda t: (0, t)),
                pl.BlockSpec((_SLAB_ROWS, _SLAB_COLS), lambda t: (0, 0)),
            ],
            out_specs=pl.BlockSpec((N_OUTPUTS, B), lambda t: (0, 0)),
            scratch_shapes=[pltpu.VMEM((N_OUTPUTS, B), jnp.float32)],
        ),
        compiler_params=pltpu.CompilerParams(
            # The batch-tile axis carries the resident logits accumulator and
            # the final dim=0 softmax, so it must stay sequential.
            # TODO(synk): on v7x a two-pass (stats, then normalize) structure
            # would let this axis be "parallel" across both TensorCores.
            dimension_semantics=("arbitrary",),
            vmem_limit_bytes=_vmem_limit_bytes(B, tb),
        ),
    )(xT, packed_params)

    return out_t.T  # back to the module's (B, n_outputs) layout


def init_params(key):
    # torch.nn.Linear-style uniform(-1/sqrt(fan_in), +1/sqrt(fan_in)).
    k1, k2, k3, k4 = jax.random.split(key, 4)
    bound1 = 1.0 / jnp.sqrt(jnp.float32(N_INPUTS))
    bound2 = 1.0 / jnp.sqrt(jnp.float32(N_HIDDEN))
    w1 = jax.random.uniform(k1, (N_INPUTS, N_HIDDEN), jnp.float32, -bound1, bound1)
    b1 = jax.random.uniform(k2, (N_HIDDEN,), jnp.float32, -bound1, bound1)
    w2 = jax.random.uniform(k3, (N_HIDDEN, N_OUTPUTS), jnp.float32, -bound2, bound2)
    b2 = jax.random.uniform(k4, (N_OUTPUTS,), jnp.float32, -bound2, bound2)
    return w1, b1, w2, b2


def reference_forward(x, w1, b1, w2, b2):
    h = jnp.maximum(x @ w1 + b1, 0.0)
    logits = h @ w2 + b2
    return jax.nn.softmax(logits, axis=0)   # dim=0, exactly as the torch module


if __name__ == "__main__":
    key = jax.random.PRNGKey(0)
    kx, kp = jax.random.split(key)

    # Small rollout batch; tile_b=128 exercises the multi-tile (grid=(2,)) path.
    B = 256
    x = jax.random.normal(kx, (B, N_INPUTS), dtype=jnp.float32)

    w1, b1, w2, b2 = init_params(kp)
    params = pack_params(w1, b1, w2, b2)   # 5 arrays -> 1 slab, done once

    out = policy_forward(x, params, tile_b=128)
    out = jax.block_until_ready(out)

    ref = reference_forward(x, w1, b1, w2, b2)
    assert out.shape == (B, N_OUTPUTS)
    assert jnp.allclose(out, ref, atol=1e-5, rtol=1e-5)

    print("KERNEL_OK")
</pallas_src>

<mosaic_0001>
module attributes {stable_mosaic.version = 11 : i64} {
  func.func @_policy_kernel(%arg0: i32, %arg1: memref<4x128xf32, #tpu.memory_space<vmem>>, %arg2: memref<40x128xf32, #tpu.memory_space<vmem>>, %arg3: memref<2x256xf32, #tpu.memory_space<vmem>>, %arg4: memref<2x256xf32, #tpu.memory_space<vmem>>) attributes {dimension_semantics = [#tpu.dimension_semantics<arbitrary>], iteration_bounds = array<i64: 2>, scalar_prefetch = 0 : i64, scratch_operands = 1 : i64, tpu.core_type = #tpu.core_type<tc>, window_params = [{transform_indices = @transform_0, window_bounds = array<i64: 4, 128>}, {pipeline_mode = #tpu.pipeline_mode<synchronous>, transform_indices = @transform_1, window_bounds = array<i64: 40, 128>}, {pipeline_mode = #tpu.pipeline_mode<synchronous>, transform_indices = @transform_2, window_bounds = array<i64: 2, 256>}]} {
    %c0 = arith.constant 0 : index
    %c0_0 = arith.constant 0 : index
    %0 = vector.load %arg2[%c0, %c0_0] : memref<40x128xf32, #tpu.memory_space<vmem>>, vector<40x128xf32>
    %1 = vector.extract_strided_slice %0 {offsets = [0, 0], sizes = [32, 4], strides = [1, 1]} : vector<40x128xf32> to vector<32x4xf32>
    %2 = vector.extract_strided_slice %0 {offsets = [0, 4], sizes = [32, 1], strides = [1, 1]} : vector<40x128xf32> to vector<32x1xf32>
    %3 = vector.extract_strided_slice %0 {offsets = [32, 0], sizes = [2, 32], strides = [1, 1]} : vector<40x128xf32> to vector<2x32xf32>
    %4 = vector.extract_strided_slice %0 {offsets = [32, 32], sizes = [2, 1], strides = [1, 1]} : vector<40x128xf32> to vector<2x1xf32>
    %c0_1 = arith.constant 0 : index
    %c0_2 = arith.constant 0 : index
    %5 = vector.load %arg1[%c0_1, %c0_2] : memref<4x128xf32, #tpu.memory_space<vmem>>, vector<4x128xf32>
    %cst = arith.constant dense<0.000000e+00> : vector<32x128xf32>
    %6 = tpu.matmul %1, %5, %cst {dimension_numbers = #tpu.dot_dimension_numbers<[1], [0], [0], [1], [0, 0, 1, 1], [], []>} : vector<32x4xf32>, vector<4x128xf32>, vector<32x128xf32> -> vector<32x128xf32>
    %7 = vector.broadcast %2 : vector<32x1xf32> to vector<32x128xf32>
    %8 = arith.addf %6, %7 : vector<32x128xf32>
    %cst_3 = arith.constant 0.000000e+00 : f32
    %9 = vector.broadcast %cst_3 : f32 to vector<32x128xf32>
    %10 = arith.maximumf %8, %9 : vector<32x128xf32>
    %cst_4 = arith.constant dense<0.000000e+00> : vector<2x128xf32>
    %11 = tpu.matmul %3, %10, %cst_4 {dimension_numbers = #tpu.dot_dimension_numbers<[1], [0], [0], [1], [0, 0, 1, 1], [], []>} : vector<2x32xf32>, vector<32x128xf32>, vector<2x128xf32> -> vector<2x128xf32>
    %12 = vector.broadcast %4 : vector<2x1xf32> to vector<2x128xf32>
    %13 = arith.addf %11, %12 : vector<2x128xf32>
    %c128_i32 = arith.constant 128 : i32
    %14 = arith.muli %arg0, %c128_i32 : i32
    %15 = tpu.assume_multiple %14, 128 : i32
    %c0_5 = arith.constant 0 : index
    %16 = arith.index_cast %15 : i32 to index
    %17 = vector.load %arg4[%c0_5, %16] : memref<2x256xf32, #tpu.memory_space<vmem>>, vector<2x128xf32>
    tpu.vector_store %arg4[%c0_5, %16], %13 {strides = array<i32>} : memref<2x256xf32, #tpu.memory_space<vmem>>, vector<2x128xf32>,
    %c1_i32 = arith.constant 1 : i32
    %18 = arith.cmpi eq, %arg0, %c1_i32 : i32
    %19 = arith.extui %18 : i1 to i32
    %c0_i32 = arith.constant 0 : i32
    %20 = arith.cmpi ne, %19, %c0_i32 : i32
    scf.if %20 {
      %c0_6 = arith.constant 0 : index
      %c0_7 = arith.constant 0 : index
      %21 = vector.load %arg4[%c0_6, %c0_7] : memref<2x256xf32, #tpu.memory_space<vmem>>, vector<2x256xf32>
      %cst_8 = arith.constant dense<0xFF800000> : vector<2xf32>
      %22 = vector.multi_reduction <maximumf>, %21, %cst_8 [1] : vector<2x256xf32> to vector<2xf32>
      %23 = vector.shape_cast %22 : vector<2xf32> to vector<2x1xf32>
      %24 = vector.broadcast %23 : vector<2x1xf32> to vector<2x256xf32>
      %25 = arith.subf %21, %24 : vector<2x256xf32>
      %26 = math.exp %25 : vector<2x256xf32>
      %cst_9 = arith.constant dense<0.000000e+00> : vector<2xf32>
      %27 = vector.multi_reduction <add>, %26, %cst_9 [1] : vector<2x256xf32> to vector<2xf32>
      %28 = vector.shape_cast %27 : vector<2xf32> to vector<2x1xf32>
      %29 = tpu.reciprocal %28 : vector<2x1xf32> -> vector<2x1xf32>
      %30 = vector.broadcast %29 : vector<2x1xf32> to vector<2x256xf32>
      %31 = arith.mulf %26, %30 : vector<2x256xf32>
      %c0_10 = arith.constant 0 : index
      %c0_11 = arith.constant 0 : index
      %32 = vector.load %arg3[%c0_10, %c0_11] : memref<2x256xf32, #tpu.memory_space<vmem>>, vector<2x256xf32>
      tpu.vector_store %arg3[%c0_10, %c0_11], %31 {strides = array<i32>} : memref<2x256xf32, #tpu.memory_space<vmem>>, vector<2x256xf32>,
    } else {
    }
    return
  }
  func.func @transform_0(%arg0: i32) -> (i32, i32) {
    %c0_i32 = arith.constant 0 : i32
    %c0_i32_0 = arith.constant 0 : i32
    return %c0_i32, %arg0 : i32, i32
  }
  func.func @transform_1(%arg0: i32) -> (i32, i32) {
    %c0_i32 = arith.constant 0 : i32
    %c0_i32_0 = arith.constant 0 : i32
    %c0_i32_1 = arith.constant 0 : i32
    return %c0_i32, %c0_i32_0 : i32, i32
  }
  func.func @transform_2(%arg0: i32) -> (i32, i32) {
    %c0_i32 = arith.constant 0 : i32
    %c0_i32_0 = arith.constant 0 : i32
    %c0_i32_1 = arith.constant 0 : i32
    return %c0_i32, %c0_i32_0 : i32, i32
  }
}

</mosaic_0001>

<llo_original>
// kernel: tpu_custom_call.1
$region0: #{tpu_custom_call.1}
  #allocation0 [shape = 'u32[]', space=smem, size = 0x4, offset = 0x4, fixed_abs, tag = 'smem constant byte address 0x4 - core index']
  #allocation1 [shape = 'u32[72,128]{1,0:T(1,128)}', space=vmem, size = 0x9000, scoped, tag = 'internal scratch']
  #allocation2 [shape = 'f32[2,256]{1,0:T(2,128)}', space=vmem, size = 0x800, scoped, tag = 'scratch operand']
  %s0 = inlined_call_operand.hbm [shape: f32[4,256], index: 0, kind: input, shape index: {}]
  %s1 = inlined_call_operand.hbm [shape: f32[40,128], index: 1, kind: input, shape index: {}]
  %s2 = inlined_call_operand.hbm [shape: f32[2,256], index: 2, kind: output, shape index: {}]
  %s3 = sld [smem:[#allocation0]]
  $region53: #{tpu_custom_call.1} parent=0
    _
  %s5 = ssub.s32 1, %s3
  %s6 = scalar_select 0, %s5, %s3
  $region1: #{tpu_custom_call.1} parent=0
    #allocation3 [shape = 'u8[4096]{0}', space=vmem, size = 0x1000, scoped, tag = 'input window, operand 0']
    #allocation4 [shape = 's32[2]{0}', space=sflag, size = 0x8, scoped, tag = 'scoped memory for tpu_custom_call.1']
    #allocation5 [shape = 's32[2]{0}', space=sflag, size = 0x8, scoped, tag = 'scoped memory for tpu_custom_call.1']
    #allocation6 [shape = 'u8[20480]{0}', space=vmem, size = 0x5000, scoped, tag = 'input window, operand 1, single buffered']
    #allocation7 [shape = 's32[1]{0}', space=sflag, size = 0x4, scoped, tag = 'scoped memory for tpu_custom_call.1']
    #allocation8 [shape = 'u8[2048]{0}', space=vmem, size = 0x800, scoped, tag = 'output window, operand 0, single buffered']
    %7 = vsyncpa [#allocation4], 0
    %s8 = scalar_lea.sflag [#allocation4], 1
    %9 = vsyncpa %s8, 0
    %10 = vsyncpa [#allocation7], 0
    %11 = vsyncpa [#allocation5], 0
    loop: start=0, step=1, limit=4
    $region2: #{tpu_custom_call.1} parent=1 // loop_pre_header
      _
    $region3: #{tpu_custom_call.1} parent=1 // loop_header
      %s13 = sphi 0, %s17
      %p14 = scmp.ge.s32.totalorder %s13, 4
      %s23 = sphi 0, %s25
      %s26 = sphi 0, %s23
      %s27 = sphi 0, %s26
      %s43 = sphi 0, %s27
      %s47 = sphi 0, %s47
      %s49 = sphi 0, %s47
      %s50 = sphi 0, %s49
      %s64 = sphi 0, %s50
      %s68 = sphi 0, %s68
      %s70 = sphi 0, %s68
      %s71 = sphi 0, %s70
      %s85 = sphi 0, %s71
    $region4: #{tpu_custom_call.1} parent=1 // loop_header_branch
      %16 = sbr.rel (%p14) target = $region8
    $region5: #{tpu_custom_call.1} parent=1 // loop_body
      %s18 = ssub.s32 %s13, 1
      %s19 = ssub.s32 %s13, 2
      %s20 = sadd.s32 %s13, 1
      %s21 = ssub.s32 %s13, %s20
      %p22 = scmp.eq.s32.totalorder %s21, 0
      %s24 = sadd.s32 %s23, 1
      %s25 = scalar_select %p22, %s23, %s24
      %p28 = pneg %p22
      %p29 = scmp.eq.s32.totalorder %s13, 1
      %p30 = por %p28, %p29
      %p31 = scmp.ne.s32.totalorder %s23, %s26
      %p32 = scmp.eq.s32.totalorder %s13, 0
      %p33 = por %p31, %p32
      %p34 = scmp.ne.s32.totalorder %s23, %s26
      %p35 = scmp.eq.s32.totalorder %s18, 1
      %p36 = por %p34, %p35
      %p37 = scmp.ne.s32.totalorder %s26, %s27
      %p38 = scmp.eq.s32.totalorder %s18, 0
      %p39 = por %p37, %p38
      %p40 = scmp.ne.s32.totalorder %s26, %s27
      %p41 = scmp.eq.s32.totalorder %s19, 1
      %p42 = por %p40, %p41
      %p44 = scmp.ne.s32.totalorder %s27, %s43
      %p45 = scmp.eq.s32.totalorder %s19, 0
      %p46 = por %p44, %p45
      %s48 = sadd.s32 %s47, 1
      %p51 = scmp.eq.s32.totalorder %s13, 1
      %p52 = scmp.ne.s32.totalorder %s47, %s49
      %p53 = scmp.eq.s32.totalorder %s13, 0
      %p54 = por %p52, %p53
      %p55 = scmp.ne.s32.totalorder %s47, %s49
      %p56 = scmp.eq.s32.totalorder %s18, 1
      %p57 = por %p55, %p56
      %p58 = scmp.ne.s32.totalorder %s49, %s50
      %p59 = scmp.eq.s32.totalorder %s18, 0
      %p60 = por %p58, %p59
      %p61 = scmp.ne.s32.totalorder %s49, %s50
      %p62 = scmp.eq.s32.totalorder %s19, 1
      %p63 = por %p61, %p62
      %p65 = scmp.ne.s32.totalorder %s50, %s64
      %p66 = scmp.eq.s32.totalorder %s19, 0
      %p67 = por %p65, %p66
      %s69 = sadd.s32 %s68, 1
      %p72 = scmp.eq.s32.totalorder %s13, 1
      %p73 = scmp.ne.s32.totalorder %s68, %s70
      %p74 = scmp.eq.s32.totalorder %s13, 0
      %p75 = por %p73, %p74
      %p76 = scmp.ne.s32.totalorder %s68, %s70
      %p77 = scmp.eq.s32.totalorder %s18, 1
      %p78 = por %p76, %p77
      %p79 = scmp.ne.s32.totalorder %s70, %s71
      %p80 = scmp.eq.s32.totalorder %s18, 0
      %p81 = por %p79, %p80
      %p82 = scmp.ne.s32.totalorder %s70, %s71
      %p83 = scmp.eq.s32.totalorder %s19, 1
      %p84 = por %p82, %p83
      %p86 = scmp.ne.s32.totalorder %s71, %s85
      %p87 = scmp.eq.s32.totalorder %s19, 0
      %p88 = por %p86, %p87
      %p89 = scmp.le.s32.totalorder 1, %s13
      %p90 = scmp.lt.s32.totalorder %s13, 3
      %p91 = pnand %p89, %p90
      %p92 = pneg %p91
      // Predicated region
      $region9: #{tpu_custom_call.1} parent=5 // pred_check
        _
      $region10: #{tpu_custom_call.1} parent=5 // pred_check_branch
        %94 = sbr.rel (%p91) target = $region12
      $region11: #{tpu_custom_call.1} parent=5 // pred_region
        %s95 = ssub.s32 %s13, 1
        // Predicated region
        $region13: #{tpu_custom_call.1} parent=11 // pred_check
          %p96 = pneg %p60
        $region14: #{tpu_custom_call.1} parent=11 // pred_check_branch
          %98 = sbr.rel (%p96) target = $region16
        $region15: #{tpu_custom_call.1} parent=11 // pred_region
          %100 = vsyncadd [#allocation7], 0
          %s101 = sshll.u32 %s1, 4
          %s102 = int_to_ptr.hbm [resolvable:$true] %s101
          %s103 = sshll.u32 [#allocation6], 4
          %s104 = int_to_ptr.vmem [resolvable:$true] %s103
          %109 = dma.hbm_to_vmem [thread:$0]  %s102, 640, %s104, [#allocation7], 128, 128, 8
        $region16: #{tpu_custom_call.1} parent=11 // pred_fallthru
          _
      $region12: #{tpu_custom_call.1} parent=5 // pred_fallthru
        _
      %p110 = scmp.lt.s32.totalorder %s13, 2
      // Predicated region
      $region17: #{tpu_custom_call.1} parent=5 // pred_check
        %p111 = pneg %p110
      $region18: #{tpu_custom_call.1} parent=5 // pred_check_branch
        %113 = sbr.rel (%p111) target = $region20
      $region19: #{tpu_custom_call.1} parent=5 // pred_region
        // Predicated region
        $region21: #{tpu_custom_call.1} parent=19 // pred_check
          %p114 = pneg %p33
        $region22: #{tpu_custom_call.1} parent=19 // pred_check_branch
          %116 = sbr.rel (%p114) target = $region24
        $region23: #{tpu_custom_call.1} parent=19 // pred_region
          %s117 = sand.u32 %s23, 1
          %s118 = scalar_lea.sflag [#allocation4], %s117
          %s119 = sand.u32 %s23, 1
          %s120 = smul.addr %s119, 4
          %s121 = scalar_lea.vmem [#allocation3], %s120
          %123 = vsyncadd %s118, 0
          %s124 = smul.addr %s13, 4
          %s125 = scalar_lea.hbm %s0, %s124
          %s127 = sshll.u32 %s125, 4
          %s128 = int_to_ptr.hbm [resolvable:$true] %s127
          %s129 = sshll.u32 %s121, 4
          %s130 = int_to_ptr.vmem [resolvable:$true] %s129
          %132 = dma.hbm_to_vmem [thread:$0]  %s128, 64, %s130, %s118
        $region24: #{tpu_custom_call.1} parent=19 // pred_fallthru
          _
      $region20: #{tpu_custom_call.1} parent=5 // pred_fallthru
        _
      %p133 = scmp.le.s32.totalorder 1, %s13
      %p134 = scmp.lt.s32.totalorder %s13, 3
      %p135 = pnand %p133, %p134
      %p136 = pneg %p135
      // Predicated region
      $region25: #{tpu_custom_call.1} parent=5 // pred_check
        _
      $region26: #{tpu_custom_call.1} parent=5 // pred_check_branch
        %138 = sbr.rel (%p135) target = $region28
      $region27: #{tpu_custom_call.1} parent=5 // pred_region
        %s139 = ssub.s32 %s13, 1
        %s140 = sand.u32 %s26, 1
        %s141 = scalar_lea.sflag [#allocation4], %s140
        %s142 = sand.u32 %s26, 1
        %s143 = smul.addr %s142, 4
        %s144 = scalar_lea.vmem [#allocation3], %s143
        // Predicated region
        $region29: #{tpu_custom_call.1} parent=27 // pred_check
          %p145 = pneg %p39
        $region30: #{tpu_custom_call.1} parent=27 // pred_check_branch
          %147 = sbr.rel (%p145) target = $region32
        $region31: #{tpu_custom_call.1} parent=27 // pred_region
          %149 = dma.done %s141, 64
        $region32: #{tpu_custom_call.1} parent=27 // pred_fallthru
          _
        // Predicated region
        $region33: #{tpu_custom_call.1} parent=27 // pred_check
          %p150 = pneg %p60
        $region34: #{tpu_custom_call.1} parent=27 // pred_check_branch
          %152 = sbr.rel (%p150) target = $region36
        $region35: #{tpu_custom_call.1} parent=27 // pred_region
          %154 = dma.done [#allocation7], 640
        $region36: #{tpu_custom_call.1} parent=27 // pred_fallthru
          _
        %s155 = sand.u32 %s26, 1
        %s156 = scalar_lea.sflag [#allocation4], %s155
        %s157 = sand.u32 %s26, 1
        %s158 = smul.addr %s157, 4
        %s159 = scalar_lea.vmem [#allocation3], %s158
        %p160 = pneg %p39
        %p161 = pneg %p36
        %p162 = pneg %p60
        %p163 = pneg %p57
        %p164 = pneg %p81
        %p165 = pneg %p78
        %v166 = vld [vmem:[#allocation6] sm:$0xff]
        %v167 = vld [vmem:[#allocation6 + $0x8] sm:$0xff]
        %v168 = vld [vmem:[#allocation6 + $0x10] sm:$0xff]
        %v169 = vld [vmem:[#allocation6 + $0x18] sm:$0xff]
        %v170 = vld [vmem:[#allocation6 + $0x20] sm:$0xff]
        %v171 = vld [vmem:[%s144] sm:$0xf]
        %173 = vset.pattern.permute.xlu0 4
        %174 = vperm.xlu0 %173, %v166
        %v175 = vpop.permute.xlu0 %174
        %178 = vset.pattern.permute.xlu0 4
        %179 = vperm.xlu0 %178, %v167
        %v180 = vpop.permute.xlu0 %179
        %183 = vset.pattern.permute.xlu0 4
        %184 = vperm.xlu0 %183, %v168
        %v185 = vpop.permute.xlu0 %184
        %188 = vset.pattern.permute.xlu0 4
        %189 = vperm.xlu0 %188, %v169
        %v190 = vpop.permute.xlu0 %189
        %vm192 = vcmask 31744
        %v193 = vsel %vm192, %v166, 0
        %v195 = vsel %vm192, %v167, 0
        %v197 = vsel %vm192, %v168, 0
        %v199 = vsel %vm192, %v169, 0
        %vm201 = vcmask 1043456
        %v203 = vsel %vm201, %v171, 0
        %205 = vmatpush.msra.mxu0 0.0
        %206 = vmatpush.msra.mxu0 0.0
        %207 = vmatpush.msra.mxu0 0.0
        %208 = vmatpush.msra.mxu0 0.0
        %209 = vmatpush.msra.mxu0 0.0
        %210 = vmatpush.msra.mxu0 0.0
        %211 = vmatpush.msra.mxu0 0.0
        %212 = vmatpush.msra.mxu0 0.0
        %213 = vmatpush.msra.mxu0 0.0
        %214 = vmatpush.msra.mxu0 0.0
        %215 = vmatpush.msra.mxu0 0.0
        %216 = vmatpush.msra.mxu0 0.0
        %217 = vmatpush.msra.mxu0 0.0
        %218 = vmatpush.msra.mxu0 0.0
        %219 = vmatpush.msra.mxu0 0.0
        %220 = vmatpush.msra.mxu0 %v203
        %221 = vmatmul.f32.gmra.mxu0 %v193
        %v222 = vpop.f32.mrf.mxu0
        %v223 = vadd.f32 %v175, %v222
        %224 = vmatmul.f32.gmra.mxu0 %v195
        %v225 = vpop.f32.mrf.mxu0
        %v226 = vadd.f32 %v180, %v225
        %227 = vmatmul.f32.gmra.mxu0 %v197
        %v228 = vpop.f32.mrf.mxu0
        %v229 = vadd.f32 %v185, %v228
        %230 = vmatmul.f32.gmra.mxu0 %v199
        %v231 = vpop.f32.mrf.mxu0
        %v232 = vadd.f32 %v190, %v231
        %233 = vdwg.mxu0
        %v234 = vmax.f32 %v223, 0.0
        %v235 = vmax.f32 %v226, 0.0
        %v236 = vmax.f32 %v229, 0.0
        %v237 = vmax.f32 %v232, 0.0
        %239 = vset.pattern.permute.xlu0 32
        %240 = vperm.xlu0 %239, %v170
        %v241 = vpop.permute.xlu0 %240
        %vm243 = vcmask 261120
        %v244 = vsel %vm243, %v170, 0
        %246 = vmatpush.msra.mxu0 0.0
        %247 = vmatpush.msra.mxu0 0.0
        %248 = vmatpush.msra.mxu0 0.0
        %249 = vmatpush.msra.mxu0 0.0
        %250 = vmatpush.msra.mxu0 0.0
        %251 = vmatpush.msra.mxu0 0.0
        %252 = vmatpush.msra.mxu0 0.0
        %253 = vmatpush.msra.mxu0 0.0
        %254 = vmatpush.msra.mxu0 0.0
        %255 = vmatpush.msra.mxu0 0.0
        %256 = vmatpush.msra.mxu0 0.0
        %257 = vmatpush.msra.mxu0 0.0
        %258 = vmatpush.msra.mxu0 %v237
        %259 = vmatpush.msra.mxu0 %v236
        %260 = vmatpush.msra.mxu0 %v235
        %261 = vmatpush.msra.mxu0 %v234
        %262 = vmatmul.f32.gmra.mxu0 %v244
        %v263 = vpop.f32.mrf.mxu0
        %v264 = vadd.f32 %v241, %v263
        %265 = vdwg.mxu0
        %s266 = smul.u32 %s18, 128
        %s267 = sshra.s32 %s266, 7
        %s268 = sand.u32 %s266, 127
        %s269 = smul.addr %s267, 2
        %s270 = scalar_lea.vmem [#allocation2], %s269
        %271 = vst [vmem:[%s270] sm:$0x3] %v264
        %p272 = scmp.eq.s32.totalorder %s18, 1
        // Predicated region
        $region37: #{tpu_custom_call.1} parent=27 // pred_check
          %p273 = pneg %p272
        $region38: #{tpu_custom_call.1} parent=27 // pred_check_branch
          %275 = sbr.rel (%p273) target = $region40
        $region39: #{tpu_custom_call.1} parent=27 // pred_region
          %v276 = vld [vmem:[#allocation2] sm:$0xf]
          %278 = vst [vmem:[#allocation1] ss:$4 sm:$0xff] %v276
          %v279 = vld.sshfl [vmem:[#allocation1] sm:$0xff pattern:$0x73625140]
          %v280 = vld.sshfl [vmem:[#allocation1 + $0x8] sm:$0xff pattern:$0x73625140]
          %vm283 = vcmask 1041408
          %v284 = vsel %vm283, %v279, -inf
          %v285 = vsel %vm283, %v280, -inf
          %v286 = vmax.f32 %v284, %v285
          %287 = vmax.xlane.f32.xlu0 %v286
          %v288 = vpop.xlane.xlu0 %287
          %v291 = vunpack.c.l.s4 269488144
          %v292 = vunpack.c.0.s8 %v291
          %v293 = vperm.slane %v288, %v292
          %v295 = vsub.f32 %v276, %v293
          %v296 = vmul.f32 %v295, 1.442695
          %v297 = vpow.pop %v296
          %299 = vst [vmem:[#allocation1] ss:$4 sm:$0xff] %v297
          %v300 = vld.sshfl [vmem:[#allocation1] sm:$0xff pattern:$0x73625140]
          %v301 = vld.sshfl [vmem:[#allocation1 + $0x8] sm:$0xff pattern:$0x73625140]
          %v304 = vsel %vm283, %v300, 0.0
          %v305 = vsel %vm283, %v301, 0.0
          %v306 = vadd.f32 %v304, %v305
          %307 = vadd.xlane.f32.xlu0 %v306
          %v308 = vpop.xlane.xlu0 %307
          %v309 = vrcp.pop %v308
          %v310 = vmul.f32 %v308, %v309
          %v311 = vsub.f32 1.0, %v310
          %v312 = vmul.f32 %v309, %v311
          %v313 = vadd.f32 %v309, %v312
          %vm314 = vweird.f32 %v308
          %vm315 = vweird.f32 %v309
          %vm316 = vmor %vm314, %vm315
          %v317 = vsel %vm316, %v309, %v313
          %v318 = vand.u32 2147483647, %v308
          %vm319 = vcmp.eq.f32.partialorder %v318, 8.507059e+37
          %v320 = vand.u32 %v308, 2147483648
          %v321 = vor.u32 1.1754944e-38, %v320
          %v322 = vsel %vm319, %v321, %v317
          %v325 = vunpack.c.l.s4 269488144
          %v326 = vunpack.c.0.s8 %v325
          %v327 = vperm.slane %v322, %v326
          %v329 = vmul.f32 %v297, %v327
          %330 = vst [vmem:[#allocation8] sm:$0xf] %v329
        $region40: #{tpu_custom_call.1} parent=27 // pred_fallthru
          _
        // Predicated region
        $region41: #{tpu_custom_call.1} parent=27 // pred_check
          %p331 = pneg %p78
        $region42: #{tpu_custom_call.1} parent=27 // pred_check_branch
          %333 = sbr.rel (%p331) target = $region44
        $region43: #{tpu_custom_call.1} parent=27 // pred_region
          %335 = vsyncadd [#allocation5], 0
          %s337 = sshll.u32 [#allocation8], 4
          %s338 = int_to_ptr.vmem [resolvable:$true] %s337
          %s339 = sshll.u32 %s2, 4
          %s340 = int_to_ptr.hbm [resolvable:$true] %s339
          %342 = dma.vmem_to_hbm [thread:$0]  %s338, 64, %s340, [#allocation5]
        $region44: #{tpu_custom_call.1} parent=27 // pred_fallthru
          _
        // Predicated region
        $region45: #{tpu_custom_call.1} parent=27 // pred_check
          %p343 = pneg %p78
        $region46: #{tpu_custom_call.1} parent=27 // pred_check_branch
          %345 = sbr.rel (%p343) target = $region48
        $region47: #{tpu_custom_call.1} parent=27 // pred_region
          %347 = dma.done [#allocation5], 64
        $region48: #{tpu_custom_call.1} parent=27 // pred_fallthru
          _
      $region28: #{tpu_custom_call.1} parent=5 // pred_fallthru
        _
      %p348 = scmp.le.s32.totalorder 2, %s13
      // Predicated region
      $region49: #{tpu_custom_call.1} parent=5 // pred_check
        %p349 = pneg %p348
      $region50: #{tpu_custom_call.1} parent=5 // pred_check_branch
        %351 = sbr.rel (%p349) target = $region52
      $region51: #{tpu_custom_call.1} parent=5 // pred_region
        %s352 = ssub.s32 %s13, 2
      $region52: #{tpu_custom_call.1} parent=5 // pred_fallthru
        _
    $region6: #{tpu_custom_call.1} parent=1 // loop_footer
      %s17 = sadd.s32 1, %s13
    $region7: #{tpu_custom_call.1} parent=1 // loop_footer_branch
      %12 = sbr.rel target = $region3
    $region8: #{tpu_custom_call.1} parent=1 // loop_exit
      _
    %353 = vsyncpa [#allocation4], 1
    %s354 = scalar_lea.sflag [#allocation4], 1
    %355 = vsyncpa %s354, 1
    %356 = vsyncpa [#allocation7], 1
    %357 = vsyncpa [#allocation5], 1
    %s358 = scalar_lea.sflag [#allocation5], 1
    %359 = vsyncpa %s358, 1

</llo_original>
